<compile_context>
chip_gen: v6e
topology: v6e:2x2x1
jax: 0.10.0
libtpu: 0.0.40
codegen_flags: <defaults>
</compile_context>

<pallas_src>
import jax
import jax.numpy as jnp
from jax.experimental import pallas as pl
from jax.experimental.pallas import tpu as pltpu


def _model_kernel(x_ref, o_ref):
    # x_ref: (TM, F) tile in VMEM;  o_ref: (TM, 2F) tile in VMEM.
    f = x_ref.shape[1]
    # One mul (free VALU slot) + two tanh (EUP) per element, computed once.
    t = jnp.tanh(jnp.tanh(2.0 * x_ref[...].astype(jnp.float32))).astype(o_ref.dtype)
    # Two direct half-stores from the same vreg data (no concatenate).
    o_ref[:, :f] = t
    o_ref[:, f:] = t


def model_forward(x, *, tm_max=256):
    """x: (B, ...) float -> (B, 2*prod(rest)), matching the torch Model."""
    b = x.shape[0]
    f = 1
    for d in x.shape[1:]:
        f *= d
    x_flat = x.reshape(b, f)  # glue reshape (torch .view) in plain JAX

    # Row tile: a multiple of 8 when the batch allows it (sublane-aligned);
    # otherwise the whole (tiny) batch in one block (block == full dim is OK).
    if b >= 8:
        tm = min(tm_max, (b // 8) * 8)
    else:
        tm = b
    grid = (pl.cdiv(b, tm),)

    return pl.pallas_call(
        _model_kernel,
        out_shape=jax.ShapeDtypeStruct((b, 2 * f), x.dtype),
        grid=grid,
        in_specs=[pl.BlockSpec((tm, f), lambda i: (i, 0))],
        out_specs=pl.BlockSpec((tm, 2 * f), lambda i: (i, 0)),
        compiler_params=pltpu.CompilerParams(
            dimension_semantics=("parallel",)),
    )(x_flat)


if __name__ == "__main__":
    key = jax.random.PRNGKey(0)
    x = jax.random.normal(key, (2, 3, 4), dtype=jnp.float32)

    out = jax.block_until_ready(model_forward(x))

    # Reference check in plain JAX (mirrors the torch forward).
    ref_y = jnp.tanh(2.0 * x.reshape(2, -1))
    ref = jnp.tanh(jnp.concatenate([ref_y, ref_y], axis=1))
    assert out.shape == (2, 24), out.shape
    assert jnp.allclose(out, ref, atol=1e-6, rtol=1e-6), "mismatch vs reference"

    print("KERNEL_OK")
</pallas_src>

<mosaic_0001>
module attributes {stable_mosaic.version = 11 : i64} {
  func.func @_model_kernel(%arg0: i32, %arg1: memref<2x12xf32, #tpu.memory_space<vmem>>, %arg2: memref<2x24xf32, #tpu.memory_space<vmem>>) attributes {dimension_semantics = [#tpu.dimension_semantics<parallel>], iteration_bounds = array<i64: 1>, scalar_prefetch = 0 : i64, scratch_operands = 0 : i64, tpu.core_type = #tpu.core_type<tc>, window_params = [{transform_indices = @transform_0, window_bounds = array<i64: 2, 12>}, {transform_indices = @transform_1, window_bounds = array<i64: 2, 24>}]} {
    %c0 = arith.constant 0 : index
    %c0_0 = arith.constant 0 : index
    %0 = vector.load %arg1[%c0, %c0_0] : memref<2x12xf32, #tpu.memory_space<vmem>>, vector<2x12xf32>
    %cst = arith.constant 2.000000e+00 : f32
    %1 = vector.broadcast %cst : f32 to vector<2x12xf32>
    %2 = arith.mulf %1, %0 : vector<2x12xf32>
    %3 = math.tanh %2 : vector<2x12xf32>
    %4 = math.tanh %3 : vector<2x12xf32>
    %c0_1 = arith.constant 0 : index
    %c0_2 = arith.constant 0 : index
    %5 = vector.load %arg2[%c0_1, %c0_2] : memref<2x24xf32, #tpu.memory_space<vmem>>, vector<2x12xf32>
    tpu.vector_store %arg2[%c0_1, %c0_2], %4 {strides = array<i32>} : memref<2x24xf32, #tpu.memory_space<vmem>>, vector<2x12xf32>,
    %c0_3 = arith.constant 0 : index
    %c12 = arith.constant 12 : index
    %6 = vector.load %arg2[%c0_3, %c12] : memref<2x24xf32, #tpu.memory_space<vmem>>, vector<2x12xf32>
    tpu.vector_store %arg2[%c0_3, %c12], %4 {strides = array<i32>} : memref<2x24xf32, #tpu.memory_space<vmem>>, vector<2x12xf32>,
    return
  }
  func.func @transform_0(%arg0: i32) -> (i32, i32) {
    %c0_i32 = arith.constant 0 : i32
    %c0_i32_0 = arith.constant 0 : i32
    return %arg0, %c0_i32 : i32, i32
  }
  func.func @transform_1(%arg0: i32) -> (i32, i32) {
    %c0_i32 = arith.constant 0 : i32
    %c0_i32_0 = arith.constant 0 : i32
    return %arg0, %c0_i32 : i32, i32
  }
}

</mosaic_0001>

<llo_original>
// kernel: tpu_custom_call.1
$region0: #{tpu_custom_call.1}
  #allocation0 [shape = 'u32[]', space=smem, size = 0x4, offset = 0x4, fixed_abs, tag = 'smem constant byte address 0x4 - core index']
  #allocation1 [shape = 'u32[144,128]{1,0:T(1,128)}', space=vmem, size = 0x12000, scoped, tag = 'internal scratch']
  %s0 = inlined_call_operand.hbm [shape: f32[2,12], index: 0, kind: input, shape index: {}]
  %s1 = inlined_call_operand.hbm [shape: f32[2,24], index: 1, kind: output, shape index: {}]
  %s2 = sld [smem:[#allocation0]]
  $region18: #{tpu_custom_call.1} parent=0
    _
  %s4 = ssub.s32 1, %s2
  %s5 = scalar_select 0, %s4, %s2
  $region1: #{tpu_custom_call.1} parent=0
    #allocation2 [shape = 'u8[1024]{0}', space=vmem, size = 0x400, scoped, tag = 'input window, operand 0, single buffered']
    #allocation3 [shape = 's32[1]{0}', space=sflag, size = 0x4, scoped, tag = 'scoped memory for tpu_custom_call.1']
    #allocation4 [shape = 's32[1]{0}', space=sflag, size = 0x4, scoped, tag = 'scoped memory for tpu_custom_call.1']
    #allocation5 [shape = 'u8[1024]{0}', space=vmem, size = 0x400, scoped, tag = 'output window, operand 0, single buffered']
    %6 = vsyncpa [#allocation3], 0
    %7 = vsyncpa [#allocation4], 0
    // Predicated region
    $region2: #{tpu_custom_call.1} parent=1 // pred_check
      _
    $region3: #{tpu_custom_call.1} parent=1 // pred_check_branch
      %9 = sbr.rel (0) target = $region5
    $region4: #{tpu_custom_call.1} parent=1 // pred_region
      %s11 = ssub.s32 32, 32
      %12 = vsyncadd [#allocation3], %s11
      %s14 = sshll.u32 [#allocation2], 4
      %s15 = int_to_ptr.vmem [resolvable:$true] %s14
      %17 = dma.hbm_to_vmem [thread:$0]  %s0, 32, %s15, [#allocation3]
    $region5: #{tpu_custom_call.1} parent=1 // pred_fallthru
      _
    // Predicated region
    $region6: #{tpu_custom_call.1} parent=1 // pred_check
      _
    $region7: #{tpu_custom_call.1} parent=1 // pred_check_branch
      %19 = sbr.rel (0) target = $region9
    $region8: #{tpu_custom_call.1} parent=1 // pred_region
      %20 = dma.done [#allocation3], 32
    $region9: #{tpu_custom_call.1} parent=1 // pred_fallthru
      _
    %v21 = vld [vmem:[#allocation2] sm:$0x3]
    %v22 = vmul.f32 %v21, 2.0
    %v23 = vtanh.pop %v22
    %v24 = vtanh.pop %v23
    %vm25 = vcmask 91136
    %26 = vst.msk [vmem:[#allocation5] sm:$0x3] %vm25, %v24
    %28 = vrot.lane.b32.xlu0 %v24, 12
    %v29 = vpop.permute.xlu0 %28
    %vm31 = vcmask 189536
    %32 = vst.msk [vmem:[#allocation5] sm:$0x3] %vm31, %v29
    // Predicated region
    $region10: #{tpu_custom_call.1} parent=1 // pred_check
      _
    $region11: #{tpu_custom_call.1} parent=1 // pred_check_branch
      %34 = sbr.rel (0) target = $region13
    $region12: #{tpu_custom_call.1} parent=1 // pred_region
      %s36 = ssub.s32 32, 32
      %37 = vsyncadd [#allocation4], %s36
      %s39 = sshll.u32 [#allocation5], 4
      %s40 = int_to_ptr.vmem [resolvable:$true] %s39
      %42 = dma.vmem_to_hbm [thread:$0]  %s40, 32, %s1, [#allocation4]
    $region13: #{tpu_custom_call.1} parent=1 // pred_fallthru
      _
    // Predicated region
    $region14: #{tpu_custom_call.1} parent=1 // pred_check
      _
    $region15: #{tpu_custom_call.1} parent=1 // pred_check_branch
      %44 = sbr.rel (0) target = $region17
    $region16: #{tpu_custom_call.1} parent=1 // pred_region
      %45 = dma.done [#allocation4], 32
    $region17: #{tpu_custom_call.1} parent=1 // pred_fallthru
      _
    %46 = vsyncpa [#allocation3], 1
    %47 = vsyncpa [#allocation4], 1

</llo_original>
